<compile_context>
chip_gen: v7x
topology: tpu7x:2x2x1
jax: 0.10.0
libtpu: 0.0.40
codegen_flags: <defaults>
</compile_context>

<pallas_src>
import functools

import jax
import jax.numpy as jnp
from jax.experimental import pallas as pl
from jax.experimental.pallas import tpu as pltpu

HIDDEN = 128          # fixed by the module: nn.Linear(input_dim, 128)
LANE = 128            # TPU lane width
_NEG_LARGE = -1e30    # mask value baked into the padded branch-bias columns


def _round_up(n, m):
    return ((n + m - 1) // m) * m


def gatenet_kernel(x_ref, w1_ref, b1_ref, w2_ref, b2_ref, out_ref, *, hard):
    # ---- MLP: Linear(D,128) -> ReLU -> Linear(128, n_pad) ----
    # Cast to bf16 only at the MXU boundary; x stays f32 in HBM (no extra pass).
    xb = x_ref[...].astype(jnp.bfloat16)                               # (TB, D)
    w1b = w1_ref[...].astype(jnp.bfloat16)                             # (D, 128)
    h = jnp.dot(xb, w1b, preferred_element_type=jnp.float32)
    h = jnp.maximum(h + b1_ref[...], 0.0)                              # (TB, 128) f32
    logits = jnp.dot(h, w2_ref[...], preferred_element_type=jnp.float32)
    # Padded branch columns carry a -1e30 bias baked into b2 -> no in-kernel mask.
    logits = logits + b2_ref[...]                                      # (TB, Np) f32

    if hard:
        # DiffSoftmax(hard=True) forward value == one-hot of argmax(logits);
        # softmax is monotone, so it is dead work on the forward path.
        idx = jnp.argmax(logits, axis=-1)[:, None]                     # (TB, 1)
        lane = jax.lax.broadcasted_iota(jnp.int32, (1, logits.shape[-1]), 1)
        out_ref[...] = jnp.where(lane == idx, 1.0, 0.0).astype(out_ref.dtype)
    else:
        # DiffSoftmax(hard=False): plain softmax over the branch dim (tau=1.0).
        m = jnp.max(logits, axis=-1, keepdims=True)
        e = jnp.exp(logits - m)
        denom = jnp.sum(e, axis=-1, keepdims=True)
        out_ref[...] = (e * pl.reciprocal(denom, approx=True)).astype(out_ref.dtype)


def gate_net_forward(x, w1, b1, w2, b2, *, hard=True, tile_b=1024,
                     out_dtype=jnp.bfloat16, trim=True):
    """x: (B, D) f32; w1: (D, 128); b1: (1, 128); w2: (128, branch); b2: (1, branch).

    Returns (B, branch) if trim else the lane-padded (B, n_pad) gate (bf16)."""
    B, D = x.shape
    branch_num = w2.shape[1]

    # Pad the branch dimension to a lane-dense width and bake the pad mask into
    # the bias so padded columns never win argmax / never contribute to softmax.
    n_pad = _round_up(max(branch_num, LANE), LANE)
    w2p = jnp.zeros((HIDDEN, n_pad), jnp.float32).at[:, :branch_num].set(
        w2.astype(jnp.float32))
    b2p = jnp.full((1, n_pad), _NEG_LARGE, jnp.float32).at[:, :branch_num].set(
        b2.astype(jnp.float32))
    w1f = w1.astype(jnp.float32)
    b1f = b1.astype(jnp.float32)

    # ---- VMEM-budgeted batch tile (safe on v7x's 64 MiB VMEM) ----
    out_itemsize = jnp.dtype(out_dtype).itemsize
    vmem_budget = 40 * 1024 * 1024
    resident = D * HIDDEN * 4 + HIDDEN * n_pad * 4 + (HIDDEN + n_pad) * 4
    per_row = 2 * D * x.dtype.itemsize + 2 * n_pad * out_itemsize   # double-buffered
    tb_cap = max(8, (vmem_budget - resident) // max(per_row, 1))
    # >=4 grid steps so the parallel batch axis shards across v7x's two TCs.
    tb = min(tile_b, tb_cap, _round_up(pl.cdiv(B, 4), 8))
    tb = max(8, (tb // 8) * 8)

    # Ragged last block: out-of-bounds rows of the final tile are dropped on
    # store (rows are independent), so no batch padding pass is needed.
    grid = (pl.cdiv(B, tb),)

    kernel = functools.partial(gatenet_kernel, hard=hard)

    out = pl.pallas_call(
        kernel,
        out_shape=jax.ShapeDtypeStruct((B, n_pad), out_dtype),
        grid=grid,
        in_specs=[
            pl.BlockSpec((tb, D), lambda i: (i, 0)),            # x: streamed per tile
            pl.BlockSpec((D, HIDDEN), lambda i: (0, 0)),        # w1: resident
            pl.BlockSpec((1, HIDDEN), lambda i: (0, 0)),        # b1: resident
            pl.BlockSpec((HIDDEN, n_pad), lambda i: (0, 0)),    # w2 (padded): resident
            pl.BlockSpec((1, n_pad), lambda i: (0, 0)),         # b2 (padded+mask): resident
        ],
        out_specs=pl.BlockSpec((tb, n_pad), lambda i: (i, 0)),  # lane-dense bf16 store
        compiler_params=pltpu.CompilerParams(
            dimension_semantics=("parallel",),                  # v7x: 2 TCs
            vmem_limit_bytes=48 * 1024 * 1024,                  # < 64 MiB v7x physical
        ),
    )(x, w1f, b1f, w2p, b2p)

    if trim:
        # Keep this call under the consumer's jit so XLA fuses the slice, or
        # pass trim=False and consume the lane-padded gate directly.
        out = out[:, :branch_num]
    return out


def init_params(key, input_dim, branch_num):
    # Deterministic synthetic init (roughly nn.Linear's uniform fan-in init).
    k1, k2, k3, k4 = jax.random.split(key, 4)
    lim1 = 1.0 / (input_dim ** 0.5)
    lim2 = 1.0 / (HIDDEN ** 0.5)
    w1 = jax.random.uniform(k1, (input_dim, HIDDEN), jnp.float32, -lim1, lim1)
    b1 = jax.random.uniform(k2, (1, HIDDEN), jnp.float32, -lim1, lim1)
    w2 = jax.random.uniform(k3, (HIDDEN, branch_num), jnp.float32, -lim2, lim2)
    b2 = jax.random.uniform(k4, (1, branch_num), jnp.float32, -lim2, lim2)
    return w1, b1, w2, b2


if __name__ == "__main__":
    key = jax.random.PRNGKey(0)
    k_x, k_p = jax.random.split(key)

    batch = 8
    input_dim = 32
    branch_num = 4

    x = jax.random.normal(k_x, (batch, input_dim), jnp.float32)
    w1, b1, w2, b2 = init_params(k_p, input_dim, branch_num)

    fwd_hard = jax.jit(functools.partial(gate_net_forward, hard=True))
    fwd_soft = jax.jit(functools.partial(gate_net_forward, hard=False))

    # Hard mode (module default): exact one-hot rows.
    out_hard = jax.block_until_ready(fwd_hard(x, w1, b1, w2, b2))
    assert out_hard.shape == (batch, branch_num)
    oh = out_hard.astype(jnp.float32)
    assert bool(jnp.all((oh == 0.0) | (oh == 1.0)))
    assert bool(jnp.all(jnp.sum(oh, axis=-1) == 1.0))

    # Reference with the same bf16-at-MXU precision flow.
    h_ref = jnp.maximum(
        jnp.dot(x.astype(jnp.bfloat16), w1.astype(jnp.bfloat16),
                preferred_element_type=jnp.float32) + b1, 0.0)
    logits_ref = jnp.dot(h_ref, w2, preferred_element_type=jnp.float32) + b2
    assert bool(jnp.all(jnp.argmax(oh, axis=-1) == jnp.argmax(logits_ref, axis=-1)))

    # Soft mode sanity: rows sum to ~1 and match a plain softmax reference.
    out_soft = jax.block_until_ready(fwd_soft(x, w1, b1, w2, b2))
    assert out_soft.shape == (batch, branch_num)
    os32 = out_soft.astype(jnp.float32)
    assert bool(jnp.allclose(jnp.sum(os32, axis=-1), 1.0, atol=2e-2))
    assert bool(jnp.allclose(os32, jax.nn.softmax(logits_ref, axis=-1), atol=3e-2))

    print("KERNEL_OK")
</pallas_src>

<mosaic_0001>
module attributes {stable_mosaic.version = 11 : i64} {
  func.func @gatenet_kernel(%arg0: i32, %arg1: memref<8x32xf32, #tpu.memory_space<vmem>>, %arg2: memref<32x128xf32, #tpu.memory_space<vmem>>, %arg3: memref<1x128xf32, #tpu.memory_space<vmem>>, %arg4: memref<128x128xf32, #tpu.memory_space<vmem>>, %arg5: memref<1x128xf32, #tpu.memory_space<vmem>>, %arg6: memref<8x128xbf16, #tpu.memory_space<vmem>>) attributes {dimension_semantics = [#tpu.dimension_semantics<parallel>], iteration_bounds = array<i64: 1>, scalar_prefetch = 0 : i64, scratch_operands = 0 : i64, tpu.core_type = #tpu.core_type<tc>, window_params = [{transform_indices = @transform_0, window_bounds = array<i64: 8, 32>}, {pipeline_mode = #tpu.pipeline_mode<synchronous>, transform_indices = @transform_1, window_bounds = array<i64: 32, 128>}, {pipeline_mode = #tpu.pipeline_mode<synchronous>, transform_indices = @transform_2, window_bounds = array<i64: 1, 128>}, {pipeline_mode = #tpu.pipeline_mode<synchronous>, transform_indices = @transform_3, window_bounds = array<i64: 128, 128>}, {pipeline_mode = #tpu.pipeline_mode<synchronous>, transform_indices = @transform_4, window_bounds = array<i64: 1, 128>}, {transform_indices = @transform_5, window_bounds = array<i64: 8, 128>}]} {
    %c0 = arith.constant 0 : index
    %c0_0 = arith.constant 0 : index
    %0 = vector.load %arg1[%c0, %c0_0] : memref<8x32xf32, #tpu.memory_space<vmem>>, vector<8x32xf32>
    %1 = arith.truncf %0 : vector<8x32xf32> to vector<8x32xbf16>
    %c0_1 = arith.constant 0 : index
    %c0_2 = arith.constant 0 : index
    %2 = vector.load %arg2[%c0_1, %c0_2] : memref<32x128xf32, #tpu.memory_space<vmem>>, vector<32x128xf32>
    %3 = arith.truncf %2 : vector<32x128xf32> to vector<32x128xbf16>
    %cst = arith.constant dense<0.000000e+00> : vector<8x128xf32>
    %4 = tpu.matmul %1, %3, %cst {dimension_numbers = #tpu.dot_dimension_numbers<[1], [0], [0], [1], [0, 0, 1, 1], [], []>} : vector<8x32xbf16>, vector<32x128xbf16>, vector<8x128xf32> -> vector<8x128xf32>
    %c0_3 = arith.constant 0 : index
    %c0_4 = arith.constant 0 : index
    %5 = vector.load %arg3[%c0_3, %c0_4] : memref<1x128xf32, #tpu.memory_space<vmem>>, vector<1x128xf32>
    %6 = vector.broadcast %5 : vector<1x128xf32> to vector<8x128xf32>
    %7 = arith.addf %4, %6 : vector<8x128xf32>
    %cst_5 = arith.constant 0.000000e+00 : f32
    %8 = vector.broadcast %cst_5 : f32 to vector<8x128xf32>
    %9 = arith.maximumf %7, %8 : vector<8x128xf32>
    %c0_6 = arith.constant 0 : index
    %c0_7 = arith.constant 0 : index
    %10 = vector.load %arg4[%c0_6, %c0_7] : memref<128x128xf32, #tpu.memory_space<vmem>>, vector<128x128xf32>
    %cst_8 = arith.constant dense<0.000000e+00> : vector<8x128xf32>
    %11 = tpu.matmul %9, %10, %cst_8 {dimension_numbers = #tpu.dot_dimension_numbers<[1], [0], [0], [1], [0, 0, 1, 1], [], []>} : vector<8x128xf32>, vector<128x128xf32>, vector<8x128xf32> -> vector<8x128xf32>
    %c0_9 = arith.constant 0 : index
    %c0_10 = arith.constant 0 : index
    %12 = vector.load %arg5[%c0_9, %c0_10] : memref<1x128xf32, #tpu.memory_space<vmem>>, vector<1x128xf32>
    %13 = vector.broadcast %12 : vector<1x128xf32> to vector<8x128xf32>
    %14 = arith.addf %11, %13 : vector<8x128xf32>
    %15 = tpu.reduce_index %14 {axis = 1 : i32, kind = #tpu.reduction_kind<arg_max>} : vector<8x128xf32> -> vector<8xi32>
    %16 = vector.shape_cast %15 : vector<8xi32> to vector<8x1xi32>
    %17 = tpu.iota {dimensions = array<i32: 1>} : vector<1x128xi32>
    %18 = vector.broadcast %17 : vector<1x128xi32> to vector<8x128xi32>
    %19 = vector.broadcast %16 : vector<8x1xi32> to vector<8x128xi32>
    %20 = arith.cmpi eq, %18, %19 : vector<8x128xi32>
    %cst_11 = arith.constant 1.000000e+00 : f32
    %cst_12 = arith.constant 0.000000e+00 : f32
    %21 = vector.broadcast %cst_11 : f32 to vector<8x128xf32>
    %22 = vector.broadcast %cst_12 : f32 to vector<8x128xf32>
    %23 = arith.select %20, %21, %22 : vector<8x128xi1>, vector<8x128xf32>
    %24 = arith.truncf %23 : vector<8x128xf32> to vector<8x128xbf16>
    %c0_13 = arith.constant 0 : index
    %c0_14 = arith.constant 0 : index
    %25 = vector.load %arg6[%c0_13, %c0_14] : memref<8x128xbf16, #tpu.memory_space<vmem>>, vector<8x128xbf16>
    tpu.vector_store %arg6[%c0_13, %c0_14], %24 {strides = array<i32>} : memref<8x128xbf16, #tpu.memory_space<vmem>>, vector<8x128xbf16>,
    return
  }
  func.func @transform_0(%arg0: i32) -> (i32, i32) {
    %c0_i32 = arith.constant 0 : i32
    %c0_i32_0 = arith.constant 0 : i32
    return %arg0, %c0_i32 : i32, i32
  }
  func.func @transform_1(%arg0: i32) -> (i32, i32) {
    %c0_i32 = arith.constant 0 : i32
    %c0_i32_0 = arith.constant 0 : i32
    %c0_i32_1 = arith.constant 0 : i32
    return %c0_i32, %c0_i32_0 : i32, i32
  }
  func.func @transform_2(%arg0: i32) -> (i32, i32) {
    %c0_i32 = arith.constant 0 : i32
    %c0_i32_0 = arith.constant 0 : i32
    %c0_i32_1 = arith.constant 0 : i32
    return %c0_i32, %c0_i32_0 : i32, i32
  }
  func.func @transform_3(%arg0: i32) -> (i32, i32) {
    %c0_i32 = arith.constant 0 : i32
    %c0_i32_0 = arith.constant 0 : i32
    %c0_i32_1 = arith.constant 0 : i32
    return %c0_i32, %c0_i32_0 : i32, i32
  }
  func.func @transform_4(%arg0: i32) -> (i32, i32) {
    %c0_i32 = arith.constant 0 : i32
    %c0_i32_0 = arith.constant 0 : i32
    %c0_i32_1 = arith.constant 0 : i32
    return %c0_i32, %c0_i32_0 : i32, i32
  }
  func.func @transform_5(%arg0: i32) -> (i32, i32) {
    %c0_i32 = arith.constant 0 : i32
    %c0_i32_0 = arith.constant 0 : i32
    return %arg0, %c0_i32 : i32, i32
  }
}

</mosaic_0001>

<llo_original>
// kernel: gate_net_forward.1
$region0: #{gate_net_forward.1}
  #allocation0 [shape = 'u32[]', space=smem, size = 0x4, offset = 0x4, fixed_abs, tag = 'smem constant byte address 0x4 - core index']
  #allocation1 [shape = 'u32[144,128]{1,0:T(1,128)}', space=vmem, size = 0x12000, scoped, tag = 'internal scratch']
  %s0 = inlined_call_operand.vmem [shape: f32[8,32], index: 0, kind: input, shape index: {}]
  %s1 = inlined_call_operand.vmem [shape: f32[32,128], index: 1, kind: input, shape index: {}]
  %s2 = inlined_call_operand.vmem [shape: f32[1,128], index: 2, kind: input, shape index: {}]
  %s3 = inlined_call_operand.vmem [shape: f32[128,128], index: 3, kind: input, shape index: {}]
  %s4 = inlined_call_operand.vmem [shape: f32[1,128], index: 4, kind: input, shape index: {}]
  %s5 = inlined_call_operand.vmem [shape: bf16[8,128], index: 5, kind: output, shape index: {}]
  %s6 = sld [smem:[#allocation0]]
  $region30: #{gate_net_forward.1} parent=0
    _
  %s8 = ssub.s32 1, %s6
  %s9 = scalar_select 0, %s8, %s6
  // Predicated region
  $region2: #{gate_net_forward.1} parent=0 // pred_check
    _
  $region3: #{gate_net_forward.1} parent=0 // pred_check_branch
    %11 = sbr.rel (0) target = $region5
  $region4: #{gate_net_forward.1} parent=0 // pred_region
    _
  $region5: #{gate_net_forward.1} parent=0 // pred_fallthru
    _
  // Predicated region
  $region6: #{gate_net_forward.1} parent=0 // pred_check
    _
  $region7: #{gate_net_forward.1} parent=0 // pred_check_branch
    %13 = sbr.rel (0) target = $region9
  $region8: #{gate_net_forward.1} parent=0 // pred_region
    _
  $region9: #{gate_net_forward.1} parent=0 // pred_fallthru
    _
  // Predicated region
  $region10: #{gate_net_forward.1} parent=0 // pred_check
    _
  $region11: #{gate_net_forward.1} parent=0 // pred_check_branch
    %15 = sbr.rel (0) target = $region13
  $region12: #{gate_net_forward.1} parent=0 // pred_region
    _
  $region13: #{gate_net_forward.1} parent=0 // pred_fallthru
    _
  // Predicated region
  $region14: #{gate_net_forward.1} parent=0 // pred_check
    _
  $region15: #{gate_net_forward.1} parent=0 // pred_check_branch
    %17 = sbr.rel (0) target = $region17
  $region16: #{gate_net_forward.1} parent=0 // pred_region
    _
  $region17: #{gate_net_forward.1} parent=0 // pred_fallthru
    _
  // Predicated region
  $region18: #{gate_net_forward.1} parent=0 // pred_check
    _
  $region19: #{gate_net_forward.1} parent=0 // pred_check_branch
    %19 = sbr.rel (0) target = $region21
  $region20: #{gate_net_forward.1} parent=0 // pred_region
    _
  $region21: #{gate_net_forward.1} parent=0 // pred_fallthru
    _
  %v21 = vld [vmem:[%s0] sm:$0xff]
  %v22 = vpack.c.bf16 %v21, %v21
  %v23 = vld [vmem:[%s1] sm:$0xff]
  %v24 = vld [vmem:[%s1 + $0x8] sm:$0xff]
  %v25 = vld [vmem:[%s1 + $0x10] sm:$0xff]
  %v26 = vld [vmem:[%s1 + $0x18] sm:$0xff]
  %v27 = vpack.c.bf16 %v24, %v23
  %v28 = vpack.c.bf16 %v26, %v25
  %v29 = vld [vmem:[%s2] sm:$0x1]
  %v31 = vlaneseq
  %v32 = vshrl.u32 %v31, 7
  %v33 = vsub.s32 0, %v32
  %v34 = vrot.slane %v29, %v33
  %vm36 = vcmask 261120
  %v38 = vsel %vm36, %v22, 0
  %40 = vmatprep.subr.bf16.mxu0 0
  %41 = vmatpush1.bf16.msra.mxu0 %v27
  %42 = vmatprep.subr.bf16.mxu0 0
  %43 = vmatpush1.bf16.msra.mxu0 %v28
  %44 = vmatprep.subr.bf16.mxu0 0
  %45 = vmatpush1.bf16.msra.mxu0 0
  %46 = vmatprep.subr.bf16.mxu0 0
  %47 = vmatpush1.bf16.msra.mxu0 0
  %48 = vmatprep.subr.bf16.mxu0 0
  %49 = vmatpush1.bf16.msra.mxu0 0
  %50 = vmatprep.subr.bf16.mxu0 0
  %51 = vmatpush1.bf16.msra.mxu0 0
  %52 = vmatprep.subr.bf16.mxu0 0
  %53 = vmatpush1.bf16.msra.mxu0 0
  %54 = vmatprep.subr.bf16.mxu0 0
  %55 = vmatpush1.bf16.msra.mxu0 0
  %56 = vmatprep.subr.bf16.mxu0 0
  %57 = vmatpush1.bf16.msra.mxu0 0
  %58 = vmatprep.subr.bf16.mxu0 0
  %59 = vmatpush1.bf16.msra.mxu0 0
  %60 = vmatprep.subr.bf16.mxu0 0
  %61 = vmatpush1.bf16.msra.mxu0 0
  %62 = vmatprep.subr.bf16.mxu0 0
  %63 = vmatpush1.bf16.msra.mxu0 0
  %64 = vmatprep.subr.bf16.mxu0 0
  %65 = vmatpush1.bf16.msra.mxu0 0
  %66 = vmatprep.subr.bf16.mxu0 0
  %67 = vmatpush1.bf16.msra.mxu0 0
  %68 = vmatprep.subr.bf16.mxu0 0
  %69 = vmatpush1.bf16.msra.mxu0 0
  %70 = vmatprep.subr.bf16.mxu0 0
  %71 = vmatpush1.bf16.msra.mxu0 0
  %72 = vmatprep.mubr.bf16.mxu0 0
  %73 = vmatmul.mubr.bf16.gmra.mrb[0].mxu0 %v38
  %v74 = vpop.f32.mrb[0].mxu0
  %v75 = vadd.f32 %v34, %v74
  %v76 = vpop.f32.mrb[0].mxu0
  %v77 = vpop.f32.mrb[0].mxu0
  %v78 = vpop.f32.mrb[0].mxu0
  %79 = vdwg.mxu0
  %v80 = vmax.f32 %v75, 0.0
  %v81 = vld [vmem:[%s3] sm:$0xff]
  %v82 = vld [vmem:[%s3 + $0x8] sm:$0xff]
  %v83 = vld [vmem:[%s3 + $0x10] sm:$0xff]
  %v84 = vld [vmem:[%s3 + $0x18] sm:$0xff]
  %v85 = vld [vmem:[%s3 + $0x20] sm:$0xff]
  %v86 = vld [vmem:[%s3 + $0x28] sm:$0xff]
  %v87 = vld [vmem:[%s3 + $0x30] sm:$0xff]
  %v88 = vld [vmem:[%s3 + $0x38] sm:$0xff]
  %v89 = vld [vmem:[%s3 + $0x40] sm:$0xff]
  %v90 = vld [vmem:[%s3 + $0x48] sm:$0xff]
  %v91 = vld [vmem:[%s3 + $0x50] sm:$0xff]
  %v92 = vld [vmem:[%s3 + $0x58] sm:$0xff]
  %v93 = vld [vmem:[%s3 + $0x60] sm:$0xff]
  %v94 = vld [vmem:[%s3 + $0x68] sm:$0xff]
  %v95 = vld [vmem:[%s3 + $0x70] sm:$0xff]
  %v96 = vld [vmem:[%s3 + $0x78] sm:$0xff]
  %v97 = vld [vmem:[%s4] sm:$0x1]
  %v99 = vlaneseq
  %v100 = vshrl.u32 %v99, 7
  %v101 = vsub.s32 0, %v100
  %v102 = vrot.slane %v97, %v101
  %104 = vmatprep.subr.mxu0 0.0
  %105 = vmatpush1.msra.mxu0 %v81
  %106 = vmatprep.subr.mxu0 0.0
  %107 = vmatpush1.msra.mxu0 %v82
  %108 = vmatprep.subr.mxu0 0.0
  %109 = vmatpush1.msra.mxu0 %v83
  %110 = vmatprep.subr.mxu0 0.0
  %111 = vmatpush1.msra.mxu0 %v84
  %112 = vmatprep.subr.mxu0 0.0
  %113 = vmatpush1.msra.mxu0 %v85
  %114 = vmatprep.subr.mxu0 0.0
  %115 = vmatpush1.msra.mxu0 %v86
  %116 = vmatprep.subr.mxu0 0.0
  %117 = vmatpush1.msra.mxu0 %v87
  %118 = vmatprep.subr.mxu0 0.0
  %119 = vmatpush1.msra.mxu0 %v88
  %120 = vmatprep.subr.mxu0 0.0
  %121 = vmatpush1.msra.mxu0 %v89
  %122 = vmatprep.subr.mxu0 0.0
  %123 = vmatpush1.msra.mxu0 %v90
  %124 = vmatprep.subr.mxu0 0.0
  %125 = vmatpush1.msra.mxu0 %v91
  %126 = vmatprep.subr.mxu0 0.0
  %127 = vmatpush1.msra.mxu0 %v92
  %128 = vmatprep.subr.mxu0 0.0
  %129 = vmatpush1.msra.mxu0 %v93
  %130 = vmatprep.subr.mxu0 0.0
  %131 = vmatpush1.msra.mxu0 %v94
  %132 = vmatprep.subr.mxu0 0.0
  %133 = vmatpush1.msra.mxu0 %v95
  %134 = vmatprep.subr.mxu0 0.0
  %135 = vmatpush1.msra.mxu0 %v96
  %136 = vmatprep.subr.mxu0 0.0
  %137 = vmatpush1.msra.mxu0 0.0
  %138 = vmatprep.subr.mxu0 0.0
  %139 = vmatpush1.msra.mxu0 0.0
  %140 = vmatprep.subr.mxu0 0.0
  %141 = vmatpush1.msra.mxu0 0.0
  %142 = vmatprep.subr.mxu0 0.0
  %143 = vmatpush1.msra.mxu0 0.0
  %144 = vmatprep.subr.mxu0 0.0
  %145 = vmatpush1.msra.mxu0 0.0
  %146 = vmatprep.subr.mxu0 0.0
  %147 = vmatpush1.msra.mxu0 0.0
  %148 = vmatprep.subr.mxu0 0.0
  %149 = vmatpush1.msra.mxu0 0.0
  %150 = vmatprep.subr.mxu0 0.0
  %151 = vmatpush1.msra.mxu0 0.0
  %152 = vmatprep.subr.mxu0 0.0
  %153 = vmatpush1.msra.mxu0 0.0
  %154 = vmatprep.subr.mxu0 0.0
  %155 = vmatpush1.msra.mxu0 0.0
  %156 = vmatprep.subr.mxu0 0.0
  %157 = vmatpush1.msra.mxu0 0.0
  %158 = vmatprep.subr.mxu0 0.0
  %159 = vmatpush1.msra.mxu0 0.0
  %160 = vmatprep.subr.mxu0 0.0
  %161 = vmatpush1.msra.mxu0 0.0
  %162 = vmatprep.subr.mxu0 0.0
  %163 = vmatpush1.msra.mxu0 0.0
  %164 = vmatprep.subr.mxu0 0.0
  %165 = vmatpush1.msra.mxu0 0.0
  %166 = vmatprep.subr.mxu0 0.0
  %167 = vmatpush1.msra.mxu0 0.0
  %168 = vmatprep.mubr.f32.mxu0 0.0
  %169 = vmatmul.mubr.f32.gmra.mrb[0].mxu0 %v80
  %v170 = vpop.f32.mrb[0].mxu0
  %v171 = vadd.f32 %v102, %v170
  %v172 = vpop.f32.mrb[0].mxu0
  %173 = vdwg.mxu0
  %174 = vmax.index.xlane.f32.xlu0 %v171
  %v175 = vpop.xlane.xlu0 %174
  %v176 = vlaneseq
  %v177 = vand.u32 %v176, 127
  %vm178 = vcmp.eq.s32.totalorder %v177, %v175
  %v179 = vsel %vm178, 1.0, 0.0
  %v180 = vpack.c.bf16 %v179, %v179
  %181 = vst [vmem:[%s5] sm:$0xf] %v180
  // Predicated region
  $region22: #{gate_net_forward.1} parent=0 // pred_check
    _
  $region23: #{gate_net_forward.1} parent=0 // pred_check_branch
    %183 = sbr.rel (0) target = $region25
  $region24: #{gate_net_forward.1} parent=0 // pred_region
    _
  $region25: #{gate_net_forward.1} parent=0 // pred_fallthru
    _
  // Predicated region
  $region26: #{gate_net_forward.1} parent=0 // pred_check
    _
  $region27: #{gate_net_forward.1} parent=0 // pred_check_branch
    %185 = sbr.rel (0) target = $region29
  $region28: #{gate_net_forward.1} parent=0 // pred_region
    _
  $region29: #{gate_net_forward.1} parent=0 // pred_fallthru
    _

</llo_original>
